<compile_context>
chip_gen: v6e
topology: v6e:2x2x1
jax: 0.10.0
libtpu: 0.0.40
codegen_flags: <defaults>
</compile_context>

<pallas_src>
import jax
import jax.numpy as jnp
from jax.experimental import pallas as pl
from jax.experimental.pallas import tpu as pltpu

MEMORY_SIZE = 4                     # -> input dim = 8 * memory_size = 32
IN_DIM = 8 * MEMORY_SIZE
H1, H2, OUT = 16, 32, 4
LANE = 128                          # lane (last-dim) padding for MXU / vst

# Row layout of the packed parameter buffer (all multiples of 8, tile-aligned).
W1_OFF = 0                          # rows [0, 32)    : W1^T (IN_DIM x H1) in cols [0,16)
W2_OFF = IN_DIM                     # rows [32, 160)  : W2^T (H1 x H2)     in cols [0,32)
W3_OFF = W2_OFF + LANE              # rows [160, 288) : W3^T (H2 x OUT)    in cols [0,4)
B1_ROW = W3_OFF + LANE              # row 288         : b1
B2_ROW = B1_ROW + 1                 # row 289         : b2
B3_ROW = B2_ROW + 1                 # row 290         : b3
R_TOTAL = 296                       # padded to a multiple of 8


def _actor_kernel(x_ref, w_ref, o_ref):
    x = x_ref[...]                                    # (TM, IN_DIM) f32

    # Static, tile-aligned slices of the resident packed-parameter buffer.
    w1 = w_ref[W1_OFF:W1_OFF + IN_DIM, :]             # (IN_DIM, LANE)
    w2 = w_ref[W2_OFF:W2_OFF + LANE, :]               # (LANE, LANE)
    w3 = w_ref[W3_OFF:W3_OFF + LANE, :]               # (LANE, LANE)
    b1 = w_ref[B1_ROW:B1_ROW + 1, :]                  # (1, LANE)
    b2 = w_ref[B2_ROW:B2_ROW + 1, :]
    b3 = w_ref[B3_ROW:B3_ROW + 1, :]

    # Three (linear + tanh) layers; all intermediates are lane-dense (TM, 128).
    # Zero-padded lanes stay exactly 0 through the chain (tanh(0 + 0) == 0).
    h = jnp.tanh(jnp.dot(x, w1, preferred_element_type=jnp.float32) + b1)
    h = jnp.tanh(jnp.dot(h, w2, preferred_element_type=jnp.float32) + b2)
    h = jnp.tanh(jnp.dot(h, w3, preferred_element_type=jnp.float32) + b3)

    # Softmax over the first OUT lanes only (PyTorch Softmax(0) on the 1-D
    # logits of each state); padded lanes are masked to -inf -> exp() == 0.
    lane = jax.lax.broadcasted_iota(jnp.int32, h.shape, dimension=1)
    logits = jnp.where(lane < OUT, h, -jnp.inf)
    m = jnp.max(logits, axis=-1, keepdims=True)
    e = jnp.exp(logits - m)
    denom = jnp.sum(e, axis=-1, keepdims=True)
    o_ref[...] = e * pl.reciprocal(denom, approx=False)


def _round_up(n, m):
    return ((n + m - 1) // m) * m


def actor_net_forward_batch(states_flat, packed_w, *, tm_max=256):
    """states_flat: (B, IN_DIM) f32 -> (B, OUT) softmax probabilities."""
    B = states_flat.shape[0]
    x = jnp.reshape(states_flat, (B, IN_DIM)).astype(jnp.float32)

    tm = min(tm_max, _round_up(B, 8))                 # row-tile (sublane multiple)
    b_pad = _round_up(B, tm)
    if b_pad != B:
        x = jnp.pad(x, ((0, b_pad - B), (0, 0)))

    out = pl.pallas_call(
        _actor_kernel,
        out_shape=jax.ShapeDtypeStruct((b_pad, LANE), jnp.float32),
        grid=(b_pad // tm,),
        in_specs=[
            pl.BlockSpec((tm, IN_DIM), lambda i: (i, 0)),
            pl.BlockSpec((R_TOTAL, LANE), lambda i: (0, 0)),   # resident weights
        ],
        out_specs=pl.BlockSpec((tm, LANE), lambda i: (i, 0)),
        compiler_params=pltpu.CompilerParams(
            dimension_semantics=("parallel",)),        # megacore splits batch
    )(x, packed_w)

    return out[:B, :OUT]


def actor_net_forward(state, packed_w):
    """Module semantics: flatten state, 3x (linear+tanh), softmax -> (4,)."""
    x = jnp.reshape(state, (1, IN_DIM))
    return actor_net_forward_batch(x, packed_w)[0]


def init_params(key):
    """nn.Linear default init: U(-1/sqrt(fan_in), 1/sqrt(fan_in))."""
    def linear(k, out_f, in_f):
        kw, kb = jax.random.split(k)
        bound = 1.0 / jnp.sqrt(in_f)
        w = jax.random.uniform(kw, (out_f, in_f), jnp.float32, -bound, bound)
        b = jax.random.uniform(kb, (out_f,), jnp.float32, -bound, bound)
        return w, b

    k1, k2, k3 = jax.random.split(key, 3)
    w1, b1 = linear(k1, H1, IN_DIM)
    w2, b2 = linear(k2, H2, H1)
    w3, b3 = linear(k3, OUT, H2)
    return (w1, b1, w2, b2, w3, b3)


def pack_params(params):
    """One-time packing: transpose weights, pad to 128 lanes, fuse into one buffer."""
    w1, b1, w2, b2, w3, b3 = params
    buf = jnp.zeros((R_TOTAL, LANE), jnp.float32)
    buf = buf.at[W1_OFF:W1_OFF + IN_DIM, 0:H1].set(w1.T)
    buf = buf.at[W2_OFF:W2_OFF + H1, 0:H2].set(w2.T)
    buf = buf.at[W3_OFF:W3_OFF + H2, 0:OUT].set(w3.T)
    buf = buf.at[B1_ROW, 0:H1].set(b1)
    buf = buf.at[B2_ROW, 0:H2].set(b2)
    buf = buf.at[B3_ROW, 0:OUT].set(b3)
    return buf


if __name__ == "__main__":
    key = jax.random.PRNGKey(0)
    kp, kx, kb = jax.random.split(key, 3)

    params = init_params(kp)
    packed = pack_params(params)            # hoisted out of the hot path

    # Single-state path (exactly the module's forward): state shape (memory_size, 8).
    state = jax.random.normal(kx, (MEMORY_SIZE, 8), dtype=jnp.float32)
    probs = actor_net_forward(state, packed)
    jax.block_until_ready(probs)

    # Batched path — amortizes launch/DMA cost, exercises multiple grid steps.
    BATCH = 512
    states = jax.random.normal(kb, (BATCH, MEMORY_SIZE, 8), dtype=jnp.float32)
    probs_b = actor_net_forward_batch(states.reshape(BATCH, IN_DIM), packed)
    jax.block_until_ready(probs_b)

    # Plain-JAX reference (mirrors the PyTorch module).
    def ref_one(s):
        w1, b1, w2, b2, w3, b3 = params
        v = jnp.reshape(s, (-1,))
        v = jnp.tanh(w1 @ v + b1)
        v = jnp.tanh(w2 @ v + b2)
        v = jnp.tanh(w3 @ v + b3)
        return jax.nn.softmax(v, axis=0)

    exp_single = ref_one(state)
    exp_batch = jax.vmap(ref_one)(states)

    assert probs.shape == (OUT,)
    assert probs_b.shape == (BATCH, OUT)
    assert jnp.allclose(probs, exp_single, atol=1e-5), (probs, exp_single)
    assert jnp.allclose(probs_b, exp_batch, atol=1e-5)
    assert jnp.allclose(jnp.sum(probs, axis=-1), 1.0, atol=1e-5)
    assert jnp.allclose(jnp.sum(probs_b, axis=-1), 1.0, atol=1e-5)
    print("KERNEL_OK")
</pallas_src>

<mosaic_0001>
module attributes {stable_mosaic.version = 11 : i64} {
  func.func @_actor_kernel(%arg0: i32, %arg1: memref<8x32xf32, #tpu.memory_space<vmem>>, %arg2: memref<296x128xf32, #tpu.memory_space<vmem>>, %arg3: memref<8x128xf32, #tpu.memory_space<vmem>>) attributes {dimension_semantics = [#tpu.dimension_semantics<parallel>], iteration_bounds = array<i64: 1>, scalar_prefetch = 0 : i64, scratch_operands = 0 : i64, tpu.core_type = #tpu.core_type<tc>, window_params = [{transform_indices = @transform_0, window_bounds = array<i64: 8, 32>}, {pipeline_mode = #tpu.pipeline_mode<synchronous>, transform_indices = @transform_1, window_bounds = array<i64: 296, 128>}, {transform_indices = @transform_2, window_bounds = array<i64: 8, 128>}]} {
    %c0 = arith.constant 0 : index
    %c0_0 = arith.constant 0 : index
    %0 = vector.load %arg1[%c0, %c0_0] : memref<8x32xf32, #tpu.memory_space<vmem>>, vector<8x32xf32>
    %c0_1 = arith.constant 0 : index
    %c0_2 = arith.constant 0 : index
    %1 = vector.load %arg2[%c0_1, %c0_2] : memref<296x128xf32, #tpu.memory_space<vmem>>, vector<32x128xf32>
    %c32 = arith.constant 32 : index
    %c0_3 = arith.constant 0 : index
    %2 = vector.load %arg2[%c32, %c0_3] : memref<296x128xf32, #tpu.memory_space<vmem>>, vector<128x128xf32>
    %c160 = arith.constant 160 : index
    %c0_4 = arith.constant 0 : index
    %3 = vector.load %arg2[%c160, %c0_4] : memref<296x128xf32, #tpu.memory_space<vmem>>, vector<128x128xf32>
    %c288 = arith.constant 288 : index
    %c0_5 = arith.constant 0 : index
    %4 = vector.load %arg2[%c288, %c0_5] : memref<296x128xf32, #tpu.memory_space<vmem>>, vector<1x128xf32>
    %c289 = arith.constant 289 : index
    %c0_6 = arith.constant 0 : index
    %5 = vector.load %arg2[%c289, %c0_6] : memref<296x128xf32, #tpu.memory_space<vmem>>, vector<1x128xf32>
    %c290 = arith.constant 290 : index
    %c0_7 = arith.constant 0 : index
    %6 = vector.load %arg2[%c290, %c0_7] : memref<296x128xf32, #tpu.memory_space<vmem>>, vector<1x128xf32>
    %cst = arith.constant dense<0.000000e+00> : vector<8x128xf32>
    %7 = tpu.matmul %0, %1, %cst {dimension_numbers = #tpu.dot_dimension_numbers<[1], [0], [0], [1], [0, 0, 1, 1], [], []>} : vector<8x32xf32>, vector<32x128xf32>, vector<8x128xf32> -> vector<8x128xf32>
    %8 = vector.broadcast %4 : vector<1x128xf32> to vector<8x128xf32>
    %9 = arith.addf %7, %8 : vector<8x128xf32>
    %10 = math.tanh %9 : vector<8x128xf32>
    %cst_8 = arith.constant dense<0.000000e+00> : vector<8x128xf32>
    %11 = tpu.matmul %10, %2, %cst_8 {dimension_numbers = #tpu.dot_dimension_numbers<[1], [0], [0], [1], [0, 0, 1, 1], [], []>} : vector<8x128xf32>, vector<128x128xf32>, vector<8x128xf32> -> vector<8x128xf32>
    %12 = vector.broadcast %5 : vector<1x128xf32> to vector<8x128xf32>
    %13 = arith.addf %11, %12 : vector<8x128xf32>
    %14 = math.tanh %13 : vector<8x128xf32>
    %cst_9 = arith.constant dense<0.000000e+00> : vector<8x128xf32>
    %15 = tpu.matmul %14, %3, %cst_9 {dimension_numbers = #tpu.dot_dimension_numbers<[1], [0], [0], [1], [0, 0, 1, 1], [], []>} : vector<8x128xf32>, vector<128x128xf32>, vector<8x128xf32> -> vector<8x128xf32>
    %16 = vector.broadcast %6 : vector<1x128xf32> to vector<8x128xf32>
    %17 = arith.addf %15, %16 : vector<8x128xf32>
    %18 = math.tanh %17 : vector<8x128xf32>
    %19 = tpu.iota {dimensions = array<i32: 1>} : vector<8x128xi32>
    %c4_i32 = arith.constant 4 : i32
    %20 = vector.broadcast %c4_i32 : i32 to vector<8x128xi32>
    %21 = arith.cmpi slt, %19, %20 : vector<8x128xi32>
    %cst_10 = arith.constant 0xFF800000 : f32
    %22 = vector.broadcast %cst_10 : f32 to vector<8x128xf32>
    %23 = arith.select %21, %18, %22 : vector<8x128xi1>, vector<8x128xf32>
    %cst_11 = arith.constant dense<0xFF800000> : vector<8xf32>
    %24 = vector.multi_reduction <maximumf>, %23, %cst_11 [1] : vector<8x128xf32> to vector<8xf32>
    %25 = vector.shape_cast %24 : vector<8xf32> to vector<8x1xf32>
    %26 = vector.broadcast %25 : vector<8x1xf32> to vector<8x128xf32>
    %27 = arith.subf %23, %26 : vector<8x128xf32>
    %28 = math.exp %27 : vector<8x128xf32>
    %cst_12 = arith.constant dense<0.000000e+00> : vector<8xf32>
    %29 = vector.multi_reduction <add>, %28, %cst_12 [1] : vector<8x128xf32> to vector<8xf32>
    %30 = vector.shape_cast %29 : vector<8xf32> to vector<8x1xf32>
    %31 = tpu.reciprocal %30 : vector<8x1xf32> -> vector<8x1xf32>
    %32 = vector.broadcast %31 : vector<8x1xf32> to vector<8x128xf32>
    %33 = arith.mulf %28, %32 : vector<8x128xf32>
    %c0_13 = arith.constant 0 : index
    %c0_14 = arith.constant 0 : index
    %34 = vector.load %arg3[%c0_13, %c0_14] : memref<8x128xf32, #tpu.memory_space<vmem>>, vector<8x128xf32>
    tpu.vector_store %arg3[%c0_13, %c0_14], %33 {strides = array<i32>} : memref<8x128xf32, #tpu.memory_space<vmem>>, vector<8x128xf32>,
    return
  }
  func.func @transform_0(%arg0: i32) -> (i32, i32) {
    %c0_i32 = arith.constant 0 : i32
    %c0_i32_0 = arith.constant 0 : i32
    return %arg0, %c0_i32 : i32, i32
  }
  func.func @transform_1(%arg0: i32) -> (i32, i32) {
    %c0_i32 = arith.constant 0 : i32
    %c0_i32_0 = arith.constant 0 : i32
    %c0_i32_1 = arith.constant 0 : i32
    return %c0_i32, %c0_i32_0 : i32, i32
  }
  func.func @transform_2(%arg0: i32) -> (i32, i32) {
    %c0_i32 = arith.constant 0 : i32
    %c0_i32_0 = arith.constant 0 : i32
    return %arg0, %c0_i32 : i32, i32
  }
}

</mosaic_0001>

<llo_original>
// kernel: tpu_custom_call.1
$region0: #{tpu_custom_call.1}
  #allocation0 [shape = 'u32[]', space=smem, size = 0x4, offset = 0x4, fixed_abs, tag = 'smem constant byte address 0x4 - core index']
  #allocation1 [shape = 'u32[144,128]{1,0:T(1,128)}', space=vmem, size = 0x12000, scoped, tag = 'internal scratch']
  %s0 = inlined_call_operand.hbm [shape: f32[8,32], index: 0, kind: input, shape index: {}]
  %s1 = inlined_call_operand.hbm [shape: f32[296,128], index: 1, kind: input, shape index: {}]
  %s2 = inlined_call_operand.hbm [shape: f32[8,128], index: 2, kind: output, shape index: {}]
  %s3 = sld [smem:[#allocation0]]
  $region26: #{tpu_custom_call.1} parent=0
    _
  %s5 = ssub.s32 1, %s3
  %s6 = scalar_select 0, %s5, %s3
  $region1: #{tpu_custom_call.1} parent=0
    #allocation2 [shape = 'u8[4096]{0}', space=vmem, size = 0x1000, scoped, tag = 'input window, operand 0, single buffered']
    #allocation3 [shape = 's32[1]{0}', space=sflag, size = 0x4, scoped, tag = 'scoped memory for tpu_custom_call.1']
    #allocation4 [shape = 's32[1]{0}', space=sflag, size = 0x4, scoped, tag = 'scoped memory for tpu_custom_call.1']
    #allocation5 [shape = 'u8[151552]{0}', space=vmem, size = 0x25000, scoped, tag = 'input window, operand 1, single buffered']
    #allocation6 [shape = 's32[1]{0}', space=sflag, size = 0x4, scoped, tag = 'scoped memory for tpu_custom_call.1']
    #allocation7 [shape = 'u8[4096]{0}', space=vmem, size = 0x1000, scoped, tag = 'output window, operand 0, single buffered']
    %7 = vsyncpa [#allocation3], 0
    %8 = vsyncpa [#allocation6], 0
    %9 = vsyncpa [#allocation4], 0
    // Predicated region
    $region2: #{tpu_custom_call.1} parent=1 // pred_check
      _
    $region3: #{tpu_custom_call.1} parent=1 // pred_check_branch
      %11 = sbr.rel (0) target = $region5
    $region4: #{tpu_custom_call.1} parent=1 // pred_region
      %s13 = ssub.s32 128, 128
      %14 = vsyncadd [#allocation3], %s13
      %s16 = sshll.u32 [#allocation2], 4
      %s17 = int_to_ptr.vmem [resolvable:$true] %s16
      %19 = dma.hbm_to_vmem [thread:$0]  %s0, 128, %s17, [#allocation3]
    $region5: #{tpu_custom_call.1} parent=1 // pred_fallthru
      _
    // Predicated region
    $region6: #{tpu_custom_call.1} parent=1 // pred_check
      _
    $region7: #{tpu_custom_call.1} parent=1 // pred_check_branch
      %21 = sbr.rel (0) target = $region9
    $region8: #{tpu_custom_call.1} parent=1 // pred_region
      %s23 = ssub.s32 4736, 4736
      %24 = vsyncadd [#allocation6], %s23
      %s25 = sshll.u32 [#allocation5], 4
      %s26 = int_to_ptr.vmem [resolvable:$true] %s25
      %31 = dma.hbm_to_vmem [thread:$0]  %s1, 4736, %s26, [#allocation6], 128, 128, 8
    $region9: #{tpu_custom_call.1} parent=1 // pred_fallthru
      _
    // Predicated region
    $region10: #{tpu_custom_call.1} parent=1 // pred_check
      _
    $region11: #{tpu_custom_call.1} parent=1 // pred_check_branch
      %33 = sbr.rel (0) target = $region13
    $region12: #{tpu_custom_call.1} parent=1 // pred_region
      %34 = dma.done [#allocation3], 128
    $region13: #{tpu_custom_call.1} parent=1 // pred_fallthru
      _
    // Predicated region
    $region14: #{tpu_custom_call.1} parent=1 // pred_check
      _
    $region15: #{tpu_custom_call.1} parent=1 // pred_check_branch
      %36 = sbr.rel (0) target = $region17
    $region16: #{tpu_custom_call.1} parent=1 // pred_region
      %37 = dma.done [#allocation6], 4736
    $region17: #{tpu_custom_call.1} parent=1 // pred_fallthru
      _
    %v38 = vld [vmem:[#allocation2] sm:$0xff]
    %v39 = vld [vmem:[#allocation5] sm:$0xff]
    %v40 = vld [vmem:[#allocation5 + $0x8] sm:$0xff]
    %v41 = vld [vmem:[#allocation5 + $0x10] sm:$0xff]
    %v42 = vld [vmem:[#allocation5 + $0x18] sm:$0xff]
    %v43 = vld [vmem:[#allocation5 + $0x20] sm:$0xff]
    %v44 = vld [vmem:[#allocation5 + $0x28] sm:$0xff]
    %v45 = vld [vmem:[#allocation5 + $0x30] sm:$0xff]
    %v46 = vld [vmem:[#allocation5 + $0x38] sm:$0xff]
    %v47 = vld [vmem:[#allocation5 + $0x40] sm:$0xff]
    %v48 = vld [vmem:[#allocation5 + $0x48] sm:$0xff]
    %v49 = vld [vmem:[#allocation5 + $0x50] sm:$0xff]
    %v50 = vld [vmem:[#allocation5 + $0x58] sm:$0xff]
    %v51 = vld [vmem:[#allocation5 + $0x60] sm:$0xff]
    %v52 = vld [vmem:[#allocation5 + $0x68] sm:$0xff]
    %v53 = vld [vmem:[#allocation5 + $0x70] sm:$0xff]
    %v54 = vld [vmem:[#allocation5 + $0x78] sm:$0xff]
    %v55 = vld [vmem:[#allocation5 + $0x80] sm:$0xff]
    %v56 = vld [vmem:[#allocation5 + $0x88] sm:$0xff]
    %v57 = vld [vmem:[#allocation5 + $0x90] sm:$0xff]
    %v58 = vld [vmem:[#allocation5 + $0x98] sm:$0xff]
    %v59 = vld [vmem:[#allocation5 + $0xa0] sm:$0xff]
    %v60 = vld [vmem:[#allocation5 + $0xa8] sm:$0xff]
    %v61 = vld [vmem:[#allocation5 + $0xb0] sm:$0xff]
    %v62 = vld [vmem:[#allocation5 + $0xb8] sm:$0xff]
    %v63 = vld [vmem:[#allocation5 + $0xc0] sm:$0xff]
    %v64 = vld [vmem:[#allocation5 + $0xc8] sm:$0xff]
    %v65 = vld [vmem:[#allocation5 + $0xd0] sm:$0xff]
    %v66 = vld [vmem:[#allocation5 + $0xd8] sm:$0xff]
    %v67 = vld [vmem:[#allocation5 + $0xe0] sm:$0xff]
    %v68 = vld [vmem:[#allocation5 + $0xe8] sm:$0xff]
    %v69 = vld [vmem:[#allocation5 + $0xf0] sm:$0xff]
    %v70 = vld [vmem:[#allocation5 + $0xf8] sm:$0xff]
    %v71 = vld [vmem:[#allocation5 + $0x100] sm:$0xff]
    %v72 = vld [vmem:[#allocation5 + $0x108] sm:$0xff]
    %v73 = vld [vmem:[#allocation5 + $0x110] sm:$0xff]
    %v74 = vld [vmem:[#allocation5 + $0x118] sm:$0xff]
    %v75 = vld [vmem:[#allocation5 + $0x120] sm:$0x1]
    %v76 = vld [vmem:[#allocation5 + $0x121] sm:$0x1]
    %v77 = vld [vmem:[#allocation5 + $0x122] sm:$0x1]
    %v78 = vlaneseq
    %v79 = vshrl.u32 %v78, 7
    %v80 = vsub.s32 0, %v79
    %v81 = vrot.slane %v75, %v80
    %vm82 = vcmask 261120
    %v84 = vsel %vm82, %v38, 0
    %86 = vmatprep.subr.mxu0 0.0
    %87 = vmatpush1.msra.mxu0 0.0
    %88 = vmatprep.subr.mxu0 0.0
    %89 = vmatpush1.msra.mxu0 0.0
    %90 = vmatprep.subr.mxu0 0.0
    %91 = vmatpush1.msra.mxu0 0.0
    %92 = vmatprep.subr.mxu0 0.0
    %93 = vmatpush1.msra.mxu0 0.0
    %94 = vmatprep.subr.mxu0 0.0
    %95 = vmatpush1.msra.mxu0 0.0
    %96 = vmatprep.subr.mxu0 0.0
    %97 = vmatpush1.msra.mxu0 0.0
    %98 = vmatprep.subr.mxu0 0.0
    %99 = vmatpush1.msra.mxu0 0.0
    %100 = vmatprep.subr.mxu0 0.0
    %101 = vmatpush1.msra.mxu0 0.0
    %102 = vmatprep.subr.mxu0 0.0
    %103 = vmatpush1.msra.mxu0 0.0
    %104 = vmatprep.subr.mxu0 0.0
    %105 = vmatpush1.msra.mxu0 0.0
    %106 = vmatprep.subr.mxu0 0.0
    %107 = vmatpush1.msra.mxu0 0.0
    %108 = vmatprep.subr.mxu0 0.0
    %109 = vmatpush1.msra.mxu0 0.0
    %110 = vmatprep.subr.mxu0 0.0
    %111 = vmatpush1.msra.mxu0 %v42
    %112 = vmatprep.subr.mxu0 0.0
    %113 = vmatpush1.msra.mxu0 %v41
    %114 = vmatprep.subr.mxu0 0.0
    %115 = vmatpush1.msra.mxu0 %v40
    %116 = vmatprep.subr.mxu0 0.0
    %117 = vmatpush1.msra.mxu0 %v39
    %118 = vmatprep.subr.mxu0 0.0
    %119 = vmatpush2.msra.mxu0 0.0
    %120 = vmatprep.subr.mxu0 0.0
    %121 = vmatpush2.msra.mxu0 0.0
    %122 = vmatprep.subr.mxu0 0.0
    %123 = vmatpush2.msra.mxu0 0.0
    %124 = vmatprep.subr.mxu0 0.0
    %125 = vmatpush2.msra.mxu0 0.0
    %126 = vmatprep.subr.mxu0 0.0
    %127 = vmatpush2.msra.mxu0 0.0
    %128 = vmatprep.subr.mxu0 0.0
    %129 = vmatpush2.msra.mxu0 0.0
    %130 = vmatprep.subr.mxu0 0.0
    %131 = vmatpush2.msra.mxu0 0.0
    %132 = vmatprep.subr.mxu0 0.0
    %133 = vmatpush2.msra.mxu0 0.0
    %134 = vmatprep.subr.mxu0 0.0
    %135 = vmatpush2.msra.mxu0 0.0
    %136 = vmatprep.subr.mxu0 0.0
    %137 = vmatpush2.msra.mxu0 0.0
    %138 = vmatprep.subr.mxu0 0.0
    %139 = vmatpush2.msra.mxu0 0.0
    %140 = vmatprep.subr.mxu0 0.0
    %141 = vmatpush2.msra.mxu0 0.0
    %142 = vmatprep.subr.mxu0 0.0
    %143 = vmatpush2.msra.mxu0 0.0
    %144 = vmatprep.subr.mxu0 0.0
    %145 = vmatpush2.msra.mxu0 0.0
    %146 = vmatprep.subr.mxu0 0.0
    %147 = vmatpush2.msra.mxu0 0.0
    %148 = vmatprep.subr.mxu0 0.0
    %149 = vmatpush2.msra.mxu0 0.0
    %150 = vmatprep.mubr.f32.mxu0 0.0
    %151 = vmatmul.mubr.f32.gmra.mxu0 %v84
    %v152 = vpop.f32.mrf.mxu0
    %v153 = vadd.f32 %v81, %v152
    %v154 = vpop.f32.mrf.mxu0
    %155 = vdwg.mxu0
    %v156 = vtanh.pop %v153
    %v157 = vlaneseq
    %v158 = vshrl.u32 %v157, 7
    %v159 = vsub.s32 0, %v158
    %v160 = vrot.slane %v76, %v159
    %161 = vmatprep.subr.mxu0 0.0
    %162 = vmatpush1.msra.mxu0 %v58
    %163 = vmatprep.subr.mxu0 0.0
    %164 = vmatpush1.msra.mxu0 %v57
    %165 = vmatprep.subr.mxu0 0.0
    %166 = vmatpush1.msra.mxu0 %v56
    %167 = vmatprep.subr.mxu0 0.0
    %168 = vmatpush1.msra.mxu0 %v55
    %169 = vmatprep.subr.mxu0 0.0
    %170 = vmatpush1.msra.mxu0 %v54
    %171 = vmatprep.subr.mxu0 0.0
    %172 = vmatpush1.msra.mxu0 %v53
    %173 = vmatprep.subr.mxu0 0.0
    %174 = vmatpush1.msra.mxu0 %v52
    %175 = vmatprep.subr.mxu0 0.0
    %176 = vmatpush1.msra.mxu0 %v51
    %177 = vmatprep.subr.mxu0 0.0
    %178 = vmatpush1.msra.mxu0 %v50
    %179 = vmatprep.subr.mxu0 0.0
    %180 = vmatpush1.msra.mxu0 %v49
    %181 = vmatprep.subr.mxu0 0.0
    %182 = vmatpush1.msra.mxu0 %v48
    %183 = vmatprep.subr.mxu0 0.0
    %184 = vmatpush1.msra.mxu0 %v47
    %185 = vmatprep.subr.mxu0 0.0
    %186 = vmatpush1.msra.mxu0 %v46
    %187 = vmatprep.subr.mxu0 0.0
    %188 = vmatpush1.msra.mxu0 %v45
    %189 = vmatprep.subr.mxu0 0.0
    %190 = vmatpush1.msra.mxu0 %v44
    %191 = vmatprep.subr.mxu0 0.0
    %192 = vmatpush1.msra.mxu0 %v43
    %193 = vmatprep.subr.mxu0 0.0
    %194 = vmatpush2.msra.mxu0 0.0
    %195 = vmatprep.subr.mxu0 0.0
    %196 = vmatpush2.msra.mxu0 0.0
    %197 = vmatprep.subr.mxu0 0.0
    %198 = vmatpush2.msra.mxu0 0.0
    %199 = vmatprep.subr.mxu0 0.0
    %200 = vmatpush2.msra.mxu0 0.0
    %201 = vmatprep.subr.mxu0 0.0
    %202 = vmatpush2.msra.mxu0 0.0
    %203 = vmatprep.subr.mxu0 0.0
    %204 = vmatpush2.msra.mxu0 0.0
    %205 = vmatprep.subr.mxu0 0.0
    %206 = vmatpush2.msra.mxu0 0.0
    %207 = vmatprep.subr.mxu0 0.0
    %208 = vmatpush2.msra.mxu0 0.0
    %209 = vmatprep.subr.mxu0 0.0
    %210 = vmatpush2.msra.mxu0 0.0
    %211 = vmatprep.subr.mxu0 0.0
    %212 = vmatpush2.msra.mxu0 0.0
    %213 = vmatprep.subr.mxu0 0.0
    %214 = vmatpush2.msra.mxu0 0.0
    %215 = vmatprep.subr.mxu0 0.0
    %216 = vmatpush2.msra.mxu0 0.0
    %217 = vmatprep.subr.mxu0 0.0
    %218 = vmatpush2.msra.mxu0 0.0
    %219 = vmatprep.subr.mxu0 0.0
    %220 = vmatpush2.msra.mxu0 0.0
    %221 = vmatprep.subr.mxu0 0.0
    %222 = vmatpush2.msra.mxu0 0.0
    %223 = vmatprep.subr.mxu0 0.0
    %224 = vmatpush2.msra.mxu0 0.0
    %225 = vmatprep.mubr.f32.mxu0 0.0
    %226 = vmatmul.mubr.f32.gmra.mxu0 %v156
    %v227 = vpop.f32.mrf.mxu0
    %v228 = vadd.f32 %v160, %v227
    %v229 = vpop.f32.mrf.mxu0
    %230 = vdwg.mxu0
    %v231 = vtanh.pop %v228
    %v232 = vlaneseq
    %v233 = vshrl.u32 %v232, 7
    %v234 = vsub.s32 0, %v233
    %v235 = vrot.slane %v77, %v234
    %236 = vmatprep.subr.mxu0 0.0
    %237 = vmatpush1.msra.mxu0 %v74
    %238 = vmatprep.subr.mxu0 0.0
    %239 = vmatpush1.msra.mxu0 %v73
    %240 = vmatprep.subr.mxu0 0.0
    %241 = vmatpush1.msra.mxu0 %v72
    %242 = vmatprep.subr.mxu0 0.0
    %243 = vmatpush1.msra.mxu0 %v71
    %244 = vmatprep.subr.mxu0 0.0
    %245 = vmatpush1.msra.mxu0 %v70
    %246 = vmatprep.subr.mxu0 0.0
    %247 = vmatpush1.msra.mxu0 %v69
    %248 = vmatprep.subr.mxu0 0.0
    %249 = vmatpush1.msra.mxu0 %v68
    %250 = vmatprep.subr.mxu0 0.0
    %251 = vmatpush1.msra.mxu0 %v67
    %252 = vmatprep.subr.mxu0 0.0
    %253 = vmatpush1.msra.mxu0 %v66
    %254 = vmatprep.subr.mxu0 0.0
    %255 = vmatpush1.msra.mxu0 %v65
    %256 = vmatprep.subr.mxu0 0.0
    %257 = vmatpush1.msra.mxu0 %v64
    %258 = vmatprep.subr.mxu0 0.0
    %259 = vmatpush1.msra.mxu0 %v63
    %260 = vmatprep.subr.mxu0 0.0
    %261 = vmatpush1.msra.mxu0 %v62
    %262 = vmatprep.subr.mxu0 0.0
    %263 = vmatpush1.msra.mxu0 %v61
    %264 = vmatprep.subr.mxu0 0.0
    %265 = vmatpush1.msra.mxu0 %v60
    %266 = vmatprep.subr.mxu0 0.0
    %267 = vmatpush1.msra.mxu0 %v59
    %268 = vmatprep.subr.mxu0 0.0
    %269 = vmatpush2.msra.mxu0 0.0
    %270 = vmatprep.subr.mxu0 0.0
    %271 = vmatpush2.msra.mxu0 0.0
    %272 = vmatprep.subr.mxu0 0.0
    %273 = vmatpush2.msra.mxu0 0.0
    %274 = vmatprep.subr.mxu0 0.0
    %275 = vmatpush2.msra.mxu0 0.0
    %276 = vmatprep.subr.mxu0 0.0
    %277 = vmatpush2.msra.mxu0 0.0
    %278 = vmatprep.subr.mxu0 0.0
    %279 = vmatpush2.msra.mxu0 0.0
    %280 = vmatprep.subr.mxu0 0.0
    %281 = vmatpush2.msra.mxu0 0.0
    %282 = vmatprep.subr.mxu0 0.0
    %283 = vmatpush2.msra.mxu0 0.0
    %284 = vmatprep.subr.mxu0 0.0
    %285 = vmatpush2.msra.mxu0 0.0
    %286 = vmatprep.subr.mxu0 0.0
    %287 = vmatpush2.msra.mxu0 0.0
    %288 = vmatprep.subr.mxu0 0.0
    %289 = vmatpush2.msra.mxu0 0.0
    %290 = vmatprep.subr.mxu0 0.0
    %291 = vmatpush2.msra.mxu0 0.0
    %292 = vmatprep.subr.mxu0 0.0
    %293 = vmatpush2.msra.mxu0 0.0
    %294 = vmatprep.subr.mxu0 0.0
    %295 = vmatpush2.msra.mxu0 0.0
    %296 = vmatprep.subr.mxu0 0.0
    %297 = vmatpush2.msra.mxu0 0.0
    %298 = vmatprep.subr.mxu0 0.0
    %299 = vmatpush2.msra.mxu0 0.0
    %300 = vmatprep.mubr.f32.mxu0 0.0
    %301 = vmatmul.mubr.f32.gmra.mxu0 %v231
    %v302 = vpop.f32.mrf.mxu0
    %v303 = vadd.f32 %v235, %v302
    %v304 = vpop.f32.mrf.mxu0
    %305 = vdwg.mxu0
    %v306 = vtanh.pop %v303
    %v307 = vlaneseq
    %v308 = vand.u32 %v307, 127
    %vm309 = vcmp.lt.s32.totalorder %v308, 4
    %v310 = vsel %vm309, %v306, -inf
    %311 = vmax.xlane.f32.xlu0 %v310
    %v312 = vpop.xlane.xlu0 %311
    %v313 = vsub.f32 %v310, %v312
    %v314 = vmul.f32 %v313, 1.442695
    %v315 = vpow.pop %v314
    %316 = vadd.xlane.f32.xlu0 %v315
    %v317 = vpop.xlane.xlu0 %316
    %v318 = vrcp.pop %v317
    %v319 = vmul.f32 %v315, %v318
    %320 = vst [vmem:[#allocation7] sm:$0xff] %v319
    // Predicated region
    $region18: #{tpu_custom_call.1} parent=1 // pred_check
      _
    $region19: #{tpu_custom_call.1} parent=1 // pred_check_branch
      %322 = sbr.rel (0) target = $region21
    $region20: #{tpu_custom_call.1} parent=1 // pred_region
      %s324 = ssub.s32 128, 128
      %325 = vsyncadd [#allocation4], %s324
      %s327 = sshll.u32 [#allocation7], 4
      %s328 = int_to_ptr.vmem [resolvable:$true] %s327
      %330 = dma.vmem_to_hbm [thread:$0]  %s328, 128, %s2, [#allocation4]
    $region21: #{tpu_custom_call.1} parent=1 // pred_fallthru
      _
    // Predicated region
    $region22: #{tpu_custom_call.1} parent=1 // pred_check
      _
    $region23: #{tpu_custom_call.1} parent=1 // pred_check_branch
      %332 = sbr.rel (0) target = $region25
    $region24: #{tpu_custom_call.1} parent=1 // pred_region
      %333 = dma.done [#allocation4], 128
    $region25: #{tpu_custom_call.1} parent=1 // pred_fallthru
      _
    %334 = vsyncpa [#allocation3], 1
    %335 = vsyncpa [#allocation6], 1
    %336 = vsyncpa [#allocation4], 1

</llo_original>
